<compile_context>
chip_gen: v7x
topology: tpu7x:2x2x1
jax: 0.10.0
libtpu: 0.0.40
codegen_flags: <defaults>
</compile_context>

<pallas_src>
import functools

import jax
import jax.numpy as jnp
from jax.experimental import pallas as pl
from jax.experimental.pallas import tpu as pltpu


def _round_up(x, m):
    return (x + m - 1) // m * m


def _sublane_min(dtype):
    # f32 -> 8 rows/vreg, bf16 -> 16, int8/fp8 -> 32.
    return max(8, 32 // jnp.dtype(dtype).itemsize)


def _euc_relu_kernel_single_k(x_ref, w_ref, b_ref, o_ref):
    # Whole K fits in one tile: fused matmul + bias + ReLU + store.
    # x_ref: (tm, K) ; w_ref: (K, tn) ; b_ref: (1, tn) ; o_ref: (tm, tn)
    y = jnp.dot(x_ref[...], w_ref[...], preferred_element_type=jnp.float32)
    y = y + b_ref[...].astype(jnp.float32)  # broadcast over rows
    o_ref[...] = jnp.maximum(y, 0.0).astype(o_ref.dtype)


def _euc_relu_kernel_multi_k(x_ref, w_ref, b_ref, o_ref, acc_ref):
    # x_ref: (tm, tk) ; w_ref: (tk, tn) ; b_ref: (1, tn)
    # o_ref: (tm, tn) ; acc_ref: (tm, tn) f32 scratch
    k = pl.program_id(2)

    @pl.when(k == 0)
    def _():
        acc_ref[...] = jnp.zeros_like(acc_ref)

    acc_ref[...] += jnp.dot(
        x_ref[...], w_ref[...], preferred_element_type=jnp.float32
    )

    @pl.when(k == pl.num_programs(2) - 1)
    def _():
        y = acc_ref[...] + b_ref[...].astype(jnp.float32)  # broadcast over rows
        o_ref[...] = jnp.maximum(y, 0.0).astype(o_ref.dtype)


@functools.partial(jax.jit, static_argnames=("tm", "tn", "tk"))
def euc_relu_layer(x, w, b=None, *, tm=256, tn=256, tk=512):
    """relu(x @ w + b) with x:[..., K], w:[K, N], b:[N] (or None)."""
    *lead, K = x.shape
    N = w.shape[1]
    x2 = x.reshape(-1, K)
    M = x2.shape[0]

    if b is None:
        b = jnp.zeros((N,), dtype=x.dtype)

    # --- effective tile sizes (clamped to the padded problem size) ----------
    sub = _sublane_min(x.dtype)
    tm_eff = min(_round_up(tm, sub), _round_up(M, sub))
    tn_eff = min(_round_up(tn, 128), _round_up(N, 128))
    tk_eff = min(_round_up(tk, 128), _round_up(K, 128))

    # --- pad to tile multiples (zeros are inert for the matmul) -------------
    M_p = _round_up(M, tm_eff)
    K_p = _round_up(K, tk_eff)
    N_p = _round_up(N, tn_eff)

    if (M_p, K_p) != (M, K):
        x2 = jnp.pad(x2, ((0, M_p - M), (0, K_p - K)))
    w_p = jnp.pad(w, ((0, K_p - K), (0, N_p - N))) if (K_p, N_p) != (K, N) else w
    b_p = jnp.pad(b, (0, N_p - N)) if N_p != N else b
    b2 = b_p.reshape(1, N_p)

    grid_m = M_p // tm_eff
    grid_n = N_p // tn_eff
    grid_k = K_p // tk_eff

    if grid_k == 1:
        # Fast path: whole contraction dim per tile, 2-D grid, no accumulator.
        out_p = pl.pallas_call(
            _euc_relu_kernel_single_k,
            out_shape=jax.ShapeDtypeStruct((M_p, N_p), x.dtype),
            grid_spec=pltpu.PrefetchScalarGridSpec(
                num_scalar_prefetch=0,
                grid=(grid_m, grid_n),
                in_specs=[
                    pl.BlockSpec((tm_eff, K_p), lambda i, j: (i, 0)),   # x tile
                    pl.BlockSpec((K_p, tn_eff), lambda i, j: (0, j)),   # w tile
                    pl.BlockSpec((1, tn_eff), lambda i, j: (0, j)),     # bias tile
                ],
                out_specs=pl.BlockSpec((tm_eff, tn_eff), lambda i, j: (i, j)),
            ),
            compiler_params=pltpu.CompilerParams(
                dimension_semantics=("parallel", "parallel"),
                vmem_limit_bytes=48 * 1024 * 1024,
            ),
        )(x2, w_p, b2)
    else:
        # General path: K reduction on the last grid axis with f32 accumulator.
        out_p = pl.pallas_call(
            _euc_relu_kernel_multi_k,
            out_shape=jax.ShapeDtypeStruct((M_p, N_p), x.dtype),
            grid_spec=pltpu.PrefetchScalarGridSpec(
                num_scalar_prefetch=0,
                grid=(grid_m, grid_n, grid_k),
                in_specs=[
                    pl.BlockSpec((tm_eff, tk_eff), lambda i, j, k: (i, k)),  # x
                    pl.BlockSpec((tk_eff, tn_eff), lambda i, j, k: (k, j)),  # w
                    pl.BlockSpec((1, tn_eff), lambda i, j, k: (0, j)),       # bias
                ],
                out_specs=pl.BlockSpec((tm_eff, tn_eff), lambda i, j, k: (i, j)),
                scratch_shapes=[pltpu.VMEM((tm_eff, tn_eff), jnp.float32)],
            ),
            compiler_params=pltpu.CompilerParams(
                dimension_semantics=("parallel", "parallel", "arbitrary"),
                vmem_limit_bytes=48 * 1024 * 1024,
            ),
        )(x2, w_p, b2)

    out2 = out_p[:M, :N]
    return out2.reshape(*lead, N)


def init_params(key, in_features, out_features, dtype=jnp.float32):
    """Deterministic init mimicking nn.Linear's default U(-1/sqrt(in), 1/sqrt(in))."""
    kw, kb = jax.random.split(key)
    bound = 1.0 / jnp.sqrt(jnp.asarray(in_features, dtype))
    # stored as [in_features, out_features] (transpose of PyTorch layout)
    w = jax.random.uniform(kw, (in_features, out_features), dtype, -bound, bound)
    b = jax.random.uniform(kb, (out_features,), dtype, -bound, bound)
    return w, b


if __name__ == "__main__":
    key = jax.random.PRNGKey(0)
    k_x, k_p, k_x2, k_p2, k_x3, k_p3 = jax.random.split(key, 6)

    # Shapes consistent with the module's forward (Linear over last axis).
    batch, seq, in_features, out_features = 2, 8, 32, 64
    x = jax.random.normal(k_x, (batch, seq, in_features), jnp.float32)
    w, b = init_params(k_p, in_features, out_features)

    out = euc_relu_layer(x, w, b)
    jax.block_until_ready(out)

    ref = jnp.maximum(x @ w + b, 0.0)
    assert out.shape == (batch, seq, out_features)
    assert jnp.allclose(out, ref, atol=1e-5, rtol=1e-5)

    # Non-tile-aligned shapes exercise the wrapper padding path (fast 2-D path).
    b2_, s2_, in2_, out2_ = 3, 5, 48, 96
    x_b = jax.random.normal(k_x2, (b2_, s2_, in2_), jnp.float32)
    w_b, bb = init_params(k_p2, in2_, out2_)
    out_b = euc_relu_layer(x_b, w_b, bb)
    jax.block_until_ready(out_b)
    ref_b = jnp.maximum(x_b @ w_b + bb, 0.0)
    assert out_b.shape == (b2_, s2_, out2_)
    assert jnp.allclose(out_b, ref_b, atol=1e-5, rtol=1e-5)

    # Large-K input exercises the K-reduction (3-D grid + accumulator) path.
    m3_, in3_, out3_ = 16, 1280, 128
    x_c = jax.random.normal(k_x3, (m3_, in3_), jnp.float32)
    w_c, bc = init_params(k_p3, in3_, out3_)
    out_c = euc_relu_layer(x_c, w_c, bc, tk=512)
    jax.block_until_ready(out_c)
    ref_c = jnp.maximum(x_c @ w_c + bc, 0.0)
    assert out_c.shape == (m3_, out3_)
    assert jnp.allclose(out_c, ref_c, atol=1e-4, rtol=1e-4)

    print("KERNEL_OK")
</pallas_src>

<mosaic_0001>
module attributes {stable_mosaic.version = 11 : i64} {
  func.func @_euc_relu_kernel_single_k(%arg0: i32, %arg1: i32, %arg2: memref<16x128xf32, #tpu.memory_space<vmem>>, %arg3: memref<128x128xf32, #tpu.memory_space<vmem>>, %arg4: memref<1x128xf32, #tpu.memory_space<vmem>>, %arg5: memref<16x128xf32, #tpu.memory_space<vmem>>) attributes {dimension_semantics = [#tpu.dimension_semantics<parallel>, #tpu.dimension_semantics<parallel>], iteration_bounds = array<i64: 1, 1>, scalar_prefetch = 0 : i64, scratch_operands = 0 : i64, tpu.core_type = #tpu.core_type<tc>, window_params = [{transform_indices = @transform_0, window_bounds = array<i64: 16, 128>}, {transform_indices = @transform_1, window_bounds = array<i64: 128, 128>}, {transform_indices = @transform_2, window_bounds = array<i64: 1, 128>}, {transform_indices = @transform_3, window_bounds = array<i64: 16, 128>}]} {
    %c0 = arith.constant 0 : index
    %c0_0 = arith.constant 0 : index
    %0 = vector.load %arg2[%c0, %c0_0] : memref<16x128xf32, #tpu.memory_space<vmem>>, vector<16x128xf32>
    %c0_1 = arith.constant 0 : index
    %c0_2 = arith.constant 0 : index
    %1 = vector.load %arg3[%c0_1, %c0_2] : memref<128x128xf32, #tpu.memory_space<vmem>>, vector<128x128xf32>
    %cst = arith.constant dense<0.000000e+00> : vector<16x128xf32>
    %2 = tpu.matmul %0, %1, %cst {dimension_numbers = #tpu.dot_dimension_numbers<[1], [0], [0], [1], [0, 0, 1, 1], [], []>} : vector<16x128xf32>, vector<128x128xf32>, vector<16x128xf32> -> vector<16x128xf32>
    %c0_3 = arith.constant 0 : index
    %c0_4 = arith.constant 0 : index
    %3 = vector.load %arg4[%c0_3, %c0_4] : memref<1x128xf32, #tpu.memory_space<vmem>>, vector<1x128xf32>
    %4 = vector.broadcast %3 : vector<1x128xf32> to vector<16x128xf32>
    %5 = arith.addf %2, %4 : vector<16x128xf32>
    %cst_5 = arith.constant 0.000000e+00 : f32
    %6 = vector.broadcast %cst_5 : f32 to vector<16x128xf32>
    %7 = arith.maximumf %5, %6 : vector<16x128xf32>
    %c0_6 = arith.constant 0 : index
    %c0_7 = arith.constant 0 : index
    %8 = vector.load %arg5[%c0_6, %c0_7] : memref<16x128xf32, #tpu.memory_space<vmem>>, vector<16x128xf32>
    tpu.vector_store %arg5[%c0_6, %c0_7], %7 {strides = array<i32>} : memref<16x128xf32, #tpu.memory_space<vmem>>, vector<16x128xf32>,
    return
  }
  func.func @transform_0(%arg0: i32, %arg1: i32) -> (i32, i32) {
    %c0_i32 = arith.constant 0 : i32
    %c0_i32_0 = arith.constant 0 : i32
    return %arg0, %c0_i32 : i32, i32
  }
  func.func @transform_1(%arg0: i32, %arg1: i32) -> (i32, i32) {
    %c0_i32 = arith.constant 0 : i32
    %c0_i32_0 = arith.constant 0 : i32
    return %c0_i32, %arg1 : i32, i32
  }
  func.func @transform_2(%arg0: i32, %arg1: i32) -> (i32, i32) {
    %c0_i32 = arith.constant 0 : i32
    %c0_i32_0 = arith.constant 0 : i32
    return %c0_i32, %arg1 : i32, i32
  }
  func.func @transform_3(%arg0: i32, %arg1: i32) -> (i32, i32) {
    %c0_i32 = arith.constant 0 : i32
    return %arg0, %arg1 : i32, i32
  }
}

</mosaic_0001>

<llo_original>
// kernel: euc_relu_layer.1
$region0: #{euc_relu_layer.1}
  #allocation0 [shape = 'u32[]', space=smem, size = 0x4, offset = 0x4, fixed_abs, tag = 'smem constant byte address 0x4 - core index']
  #allocation1 [shape = 'u32[144,128]{1,0:T(1,128)}', space=vmem, size = 0x12000, scoped, tag = 'internal scratch']
  %s0 = inlined_call_operand.vmem [shape: f32[16,128], index: 0, kind: input, shape index: {}]
  %s1 = inlined_call_operand.vmem [shape: f32[128,128], index: 1, kind: input, shape index: {}]
  %s2 = inlined_call_operand.vmem [shape: f32[1,128], index: 2, kind: input, shape index: {}]
  %s3 = inlined_call_operand.vmem [shape: f32[16,128], index: 3, kind: output, shape index: {}]
  %s4 = sld [smem:[#allocation0]]
  $region22: #{euc_relu_layer.1} parent=0
    _
  %s6 = ssub.s32 1, %s4
  %s7 = scalar_select 0, %s6, %s4
  // Predicated region
  $region2: #{euc_relu_layer.1} parent=0 // pred_check
    _
  $region3: #{euc_relu_layer.1} parent=0 // pred_check_branch
    %9 = sbr.rel (0) target = $region5
  $region4: #{euc_relu_layer.1} parent=0 // pred_region
    _
  $region5: #{euc_relu_layer.1} parent=0 // pred_fallthru
    _
  // Predicated region
  $region6: #{euc_relu_layer.1} parent=0 // pred_check
    _
  $region7: #{euc_relu_layer.1} parent=0 // pred_check_branch
    %11 = sbr.rel (0) target = $region9
  $region8: #{euc_relu_layer.1} parent=0 // pred_region
    _
  $region9: #{euc_relu_layer.1} parent=0 // pred_fallthru
    _
  // Predicated region
  $region10: #{euc_relu_layer.1} parent=0 // pred_check
    _
  $region11: #{euc_relu_layer.1} parent=0 // pred_check_branch
    %13 = sbr.rel (0) target = $region13
  $region12: #{euc_relu_layer.1} parent=0 // pred_region
    _
  $region13: #{euc_relu_layer.1} parent=0 // pred_fallthru
    _
  %v14 = vld [vmem:[%s0] sm:$0xff]
  %v15 = vld [vmem:[%s0 + $0x8] sm:$0xff]
  %v16 = vld [vmem:[%s1] sm:$0xff]
  %v17 = vld [vmem:[%s1 + $0x8] sm:$0xff]
  %v18 = vld [vmem:[%s1 + $0x10] sm:$0xff]
  %v19 = vld [vmem:[%s1 + $0x18] sm:$0xff]
  %v20 = vld [vmem:[%s1 + $0x20] sm:$0xff]
  %v21 = vld [vmem:[%s1 + $0x28] sm:$0xff]
  %v22 = vld [vmem:[%s1 + $0x30] sm:$0xff]
  %v23 = vld [vmem:[%s1 + $0x38] sm:$0xff]
  %v24 = vld [vmem:[%s1 + $0x40] sm:$0xff]
  %v25 = vld [vmem:[%s1 + $0x48] sm:$0xff]
  %v26 = vld [vmem:[%s1 + $0x50] sm:$0xff]
  %v27 = vld [vmem:[%s1 + $0x58] sm:$0xff]
  %v28 = vld [vmem:[%s1 + $0x60] sm:$0xff]
  %v29 = vld [vmem:[%s1 + $0x68] sm:$0xff]
  %v30 = vld [vmem:[%s1 + $0x70] sm:$0xff]
  %v31 = vld [vmem:[%s1 + $0x78] sm:$0xff]
  %v32 = vld [vmem:[%s2] sm:$0x1]
  %v34 = vlaneseq
  %v35 = vshrl.u32 %v34, 7
  %v36 = vsub.s32 0, %v35
  %v37 = vrot.slane %v32, %v36
  %39 = vmatprep.subr.mxu0 0.0
  %40 = vmatpush1.msra.mxu0 %v16
  %41 = vmatprep.subr.mxu0 0.0
  %42 = vmatpush1.msra.mxu0 %v17
  %43 = vmatprep.subr.mxu0 0.0
  %44 = vmatpush1.msra.mxu0 %v18
  %45 = vmatprep.subr.mxu0 0.0
  %46 = vmatpush1.msra.mxu0 %v19
  %47 = vmatprep.subr.mxu0 0.0
  %48 = vmatpush1.msra.mxu0 %v20
  %49 = vmatprep.subr.mxu0 0.0
  %50 = vmatpush1.msra.mxu0 %v21
  %51 = vmatprep.subr.mxu0 0.0
  %52 = vmatpush1.msra.mxu0 %v22
  %53 = vmatprep.subr.mxu0 0.0
  %54 = vmatpush1.msra.mxu0 %v23
  %55 = vmatprep.subr.mxu0 0.0
  %56 = vmatpush1.msra.mxu0 %v24
  %57 = vmatprep.subr.mxu0 0.0
  %58 = vmatpush1.msra.mxu0 %v25
  %59 = vmatprep.subr.mxu0 0.0
  %60 = vmatpush1.msra.mxu0 %v26
  %61 = vmatprep.subr.mxu0 0.0
  %62 = vmatpush1.msra.mxu0 %v27
  %63 = vmatprep.subr.mxu0 0.0
  %64 = vmatpush1.msra.mxu0 %v28
  %65 = vmatprep.subr.mxu0 0.0
  %66 = vmatpush1.msra.mxu0 %v29
  %67 = vmatprep.subr.mxu0 0.0
  %68 = vmatpush1.msra.mxu0 %v30
  %69 = vmatprep.subr.mxu0 0.0
  %70 = vmatpush1.msra.mxu0 %v31
  %71 = vmatprep.subr.mxu0 0.0
  %72 = vmatpush1.msra.mxu0 0.0
  %73 = vmatprep.subr.mxu0 0.0
  %74 = vmatpush1.msra.mxu0 0.0
  %75 = vmatprep.subr.mxu0 0.0
  %76 = vmatpush1.msra.mxu0 0.0
  %77 = vmatprep.subr.mxu0 0.0
  %78 = vmatpush1.msra.mxu0 0.0
  %79 = vmatprep.subr.mxu0 0.0
  %80 = vmatpush1.msra.mxu0 0.0
  %81 = vmatprep.subr.mxu0 0.0
  %82 = vmatpush1.msra.mxu0 0.0
  %83 = vmatprep.subr.mxu0 0.0
  %84 = vmatpush1.msra.mxu0 0.0
  %85 = vmatprep.subr.mxu0 0.0
  %86 = vmatpush1.msra.mxu0 0.0
  %87 = vmatprep.subr.mxu0 0.0
  %88 = vmatpush1.msra.mxu0 0.0
  %89 = vmatprep.subr.mxu0 0.0
  %90 = vmatpush1.msra.mxu0 0.0
  %91 = vmatprep.subr.mxu0 0.0
  %92 = vmatpush1.msra.mxu0 0.0
  %93 = vmatprep.subr.mxu0 0.0
  %94 = vmatpush1.msra.mxu0 0.0
  %95 = vmatprep.subr.mxu0 0.0
  %96 = vmatpush1.msra.mxu0 0.0
  %97 = vmatprep.subr.mxu0 0.0
  %98 = vmatpush1.msra.mxu0 0.0
  %99 = vmatprep.subr.mxu0 0.0
  %100 = vmatpush1.msra.mxu0 0.0
  %101 = vmatprep.subr.mxu0 0.0
  %102 = vmatpush1.msra.mxu0 0.0
  %103 = vmatprep.mubr.f32.mxu0 0.0
  %104 = vmatmul.mubr.f32.gmra.mrb[0].mxu0 %v14
  %v105 = vpop.f32.mrb[0].mxu0
  %v106 = vadd.f32 %v37, %v105
  %v107 = vpop.f32.mrb[0].mxu0
  %108 = vmatprep.mubr.f32.mxu0 0.0
  %109 = vmatmul.mubr.f32.gmra.mrb[0].mxu0 %v15
  %v110 = vpop.f32.mrb[0].mxu0
  %v111 = vadd.f32 %v37, %v110
  %v112 = vpop.f32.mrb[0].mxu0
  %113 = vdwg.mxu0
  %v114 = vmax.f32 %v106, 0.0
  %v115 = vmax.f32 %v111, 0.0
  %116 = vst [vmem:[%s3] sm:$0xff] %v114
  %117 = vst [vmem:[%s3 + $0x8] sm:$0xff] %v115
  // Predicated region
  $region14: #{euc_relu_layer.1} parent=0 // pred_check
    _
  $region15: #{euc_relu_layer.1} parent=0 // pred_check_branch
    %119 = sbr.rel (0) target = $region17
  $region16: #{euc_relu_layer.1} parent=0 // pred_region
    _
  $region17: #{euc_relu_layer.1} parent=0 // pred_fallthru
    _
  // Predicated region
  $region18: #{euc_relu_layer.1} parent=0 // pred_check
    _
  $region19: #{euc_relu_layer.1} parent=0 // pred_check_branch
    %121 = sbr.rel (0) target = $region21
  $region20: #{euc_relu_layer.1} parent=0 // pred_region
    _
  $region21: #{euc_relu_layer.1} parent=0 // pred_fallthru
    _

</llo_original>
